<compile_context>
chip_gen: v5e
topology: v5e:2x2
jax: 0.10.0
libtpu: 0.0.40
codegen_flags: <defaults>
</compile_context>

<pallas_src>
import functools
from typing import List, Tuple

import jax
import jax.numpy as jnp
from jax.experimental import pallas as pl
from jax.experimental.pallas import tpu as pltpu

LANE = 128
SUBLANE = 8
MAX_BATCH_TILE = 256


def _round_up(x: int, m: int) -> int:
    return ((x + m - 1) // m) * m


# ----------------------------------------------------------------------------
# Fused kernel: all layers of the autoencoder in one body.
# ----------------------------------------------------------------------------
def _fused_autoencoder_kernel(x_ref, w_ref, b_ref, rec_ref, code_ref,
                              *, acts: Tuple[str, ...], code_layer: int):
    # x_ref:   (TB, P)      padded input tile
    # w_ref:   (L, P, P)    all padded weights (in, out) layout
    # b_ref:   (L, 1, P)    all padded biases
    # rec_ref: (TB, P)      padded reconstruction
    # code_ref:(TB, P)      padded latent code
    h = x_ref[...].astype(jnp.float32)
    num_layers = len(acts)
    for l in range(num_layers):                       # static unroll (L is tiny)
        w = w_ref[l]                                  # (P, P)
        b = b_ref[l]                                  # (1, P)
        y = jnp.dot(h, w, preferred_element_type=jnp.float32) + b
        act = acts[l]
        if act == "relu":
            h = jnp.maximum(y, 0.0)
        elif act == "tanh":
            h = jnp.tanh(y)
        else:
            raise ValueError(f"unknown activation {act}")
        if l == code_layer:
            code_ref[...] = h.astype(code_ref.dtype)
    rec_ref[...] = h.astype(rec_ref.dtype)


def symmetric_autoencoder_forward(params, x: jax.Array,
                                  layer_sizes: List[int]) -> Tuple[jax.Array, jax.Array]:
    """Fused Pallas forward. Returns (recovered, code) like the PyTorch module."""
    layers = params["encoder"] + params["decoder"]
    n_enc = len(params["encoder"])
    n_dec = len(params["decoder"])
    num_layers = n_enc + n_dec
    acts = tuple(["relu"] * n_enc + ["relu"] * (n_dec - 1) + ["tanh"])
    code_layer = n_enc - 1

    B, in_size = x.shape
    code_size = layer_sizes[-1]

    # Lane-dense padded feature width (all layer widths are <= in/out of encoder).
    P = _round_up(max(layer_sizes), LANE)
    # TODO(synk): if layer widths ever grow past a few thousand, tile K/N with a
    # VMEM f32 accumulator instead of keeping full (P, P) weights resident
    # (v7x has only 64 MiB VMEM), and consider bf16 weights on v6e/v7x.

    # Batch tiling: whole (8-aligned) batch in one step when small, else 256-row
    # tiles (parallel grid axis -> megacore sharding on v7x).
    b_pad8 = _round_up(B, SUBLANE)
    batch_tile = min(b_pad8, MAX_BATCH_TILE)
    B_pad = _round_up(B, batch_tile)
    grid = (B_pad // batch_tile,)

    # Stack + zero-pad all parameters once (single DMA per grid step each).
    w_all = jnp.zeros((num_layers, P, P), jnp.float32)
    b_all = jnp.zeros((num_layers, 1, P), jnp.float32)
    for l, (w, b) in enumerate(layers):
        k, n = w.shape
        w_all = w_all.at[l, :k, :n].set(w.astype(jnp.float32))
        b_all = b_all.at[l, 0, :n].set(b.astype(jnp.float32))

    # Zero-pad the input to (B_pad, P).
    x_pad = jnp.zeros((B_pad, P), x.dtype).at[:B, :in_size].set(x)

    kernel = functools.partial(_fused_autoencoder_kernel,
                               acts=acts, code_layer=code_layer)

    rec_pad, code_pad = pl.pallas_call(
        kernel,
        out_shape=(jax.ShapeDtypeStruct((B_pad, P), x.dtype),
                   jax.ShapeDtypeStruct((B_pad, P), x.dtype)),
        grid_spec=pltpu.PrefetchScalarGridSpec(
            num_scalar_prefetch=0,
            grid=grid,
            in_specs=[
                pl.BlockSpec((batch_tile, P), lambda i: (i, 0)),          # x tile
                pl.BlockSpec((num_layers, P, P), lambda i: (0, 0, 0)),    # all weights
                pl.BlockSpec((num_layers, 1, P), lambda i: (0, 0, 0)),    # all biases
            ],
            out_specs=[
                pl.BlockSpec((batch_tile, P), lambda i: (i, 0)),          # recovered
                pl.BlockSpec((batch_tile, P), lambda i: (i, 0)),          # code
            ],
        ),
        compiler_params=pltpu.CompilerParams(
            dimension_semantics=("parallel",),
        ),
    )(x_pad, w_all, b_all)

    recovered = rec_pad[:B, :in_size]
    code = code_pad[:B, :code_size]
    return recovered, code


# ----------------------------------------------------------------------------
# Parameter construction (mirrors nn.Linear default init) + pure-JAX reference
# ----------------------------------------------------------------------------
def init_params(key: jax.Array, layer_sizes: List[int]):
    if len(layer_sizes) < 2:
        raise ValueError("layer_sizes must have at least 2 elements.")

    def make_linear(k, in_size, out_size):
        kw, kb = jax.random.split(k)
        bound = 1.0 / jnp.sqrt(jnp.float32(in_size))
        w = jax.random.uniform(kw, (in_size, out_size), jnp.float32, -bound, bound)
        b = jax.random.uniform(kb, (out_size,), jnp.float32, -bound, bound)
        return w, b

    params = {"encoder": [], "decoder": []}
    in_size = layer_sizes[0]
    for out_size in layer_sizes[1:]:
        key, sub = jax.random.split(key)
        params["encoder"].append(make_linear(sub, in_size, out_size))
        in_size = out_size

    rev = list(reversed(layer_sizes))
    in_size = rev[0]
    for out_size in rev[1:]:
        key, sub = jax.random.split(key)
        params["decoder"].append(make_linear(sub, in_size, out_size))
        in_size = out_size
    return params


def _reference_forward(params, x):
    h = x
    for (w, b) in params["encoder"]:
        h = jnp.maximum(h @ w + b, 0.0)
    code = h
    n_dec = len(params["decoder"])
    h = code
    for i, (w, b) in enumerate(params["decoder"]):
        h = h @ w + b
        h = jnp.maximum(h, 0.0) if i < n_dec - 1 else jnp.tanh(h)
    return h, code


if __name__ == "__main__":
    layer_sizes = [32, 16, 8]   # input_size=32, code_size=8
    batch = 16

    key = jax.random.PRNGKey(0)
    k_params, k_x = jax.random.split(key)
    params = init_params(k_params, layer_sizes)
    x = jax.random.normal(k_x, (batch, layer_sizes[0]), jnp.float32)

    recovered, code = symmetric_autoencoder_forward(params, x, layer_sizes)
    recovered = jax.block_until_ready(recovered)
    code = jax.block_until_ready(code)

    ref_rec, ref_code = _reference_forward(params, x)
    assert recovered.shape == (batch, layer_sizes[0])
    assert code.shape == (batch, layer_sizes[-1])
    assert jnp.allclose(recovered, ref_rec, atol=1e-5, rtol=1e-5)
    assert jnp.allclose(code, ref_code, atol=1e-5, rtol=1e-5)

    print("KERNEL_OK")
</pallas_src>

<mosaic_0001>
module attributes {stable_mosaic.version = 11 : i64} {
  func.func @_fused_autoencoder_kernel(%arg0: i32, %arg1: memref<16x128xf32, #tpu.memory_space<vmem>>, %arg2: memref<4x128x128xf32, #tpu.memory_space<vmem>>, %arg3: memref<4x1x128xf32, #tpu.memory_space<vmem>>, %arg4: memref<16x128xf32, #tpu.memory_space<vmem>>, %arg5: memref<16x128xf32, #tpu.memory_space<vmem>>) attributes {dimension_semantics = [#tpu.dimension_semantics<parallel>], iteration_bounds = array<i64: 1>, scalar_prefetch = 0 : i64, scratch_operands = 0 : i64, tpu.core_type = #tpu.core_type<tc>, window_params = [{transform_indices = @transform_0, window_bounds = array<i64: 16, 128>}, {pipeline_mode = #tpu.pipeline_mode<synchronous>, transform_indices = @transform_1, window_bounds = array<i64: 4, 128, 128>}, {pipeline_mode = #tpu.pipeline_mode<synchronous>, transform_indices = @transform_2, window_bounds = array<i64: 4, 1, 128>}, {transform_indices = @transform_3, window_bounds = array<i64: 16, 128>}, {transform_indices = @transform_4, window_bounds = array<i64: 16, 128>}]} {
    %c0 = arith.constant 0 : index
    %c0_0 = arith.constant 0 : index
    %0 = vector.load %arg1[%c0, %c0_0] : memref<16x128xf32, #tpu.memory_space<vmem>>, vector<16x128xf32>
    %c0_1 = arith.constant 0 : index
    %c0_2 = arith.constant 0 : index
    %c0_3 = arith.constant 0 : index
    %1 = vector.load %arg2[%c0_1, %c0_2, %c0_3] : memref<4x128x128xf32, #tpu.memory_space<vmem>>, vector<1x128x128xf32>
    %2 = vector.shape_cast %1 : vector<1x128x128xf32> to vector<128x128xf32>
    %c0_4 = arith.constant 0 : index
    %c0_5 = arith.constant 0 : index
    %c0_6 = arith.constant 0 : index
    %3 = vector.load %arg3[%c0_4, %c0_5, %c0_6] : memref<4x1x128xf32, #tpu.memory_space<vmem>>, vector<1x1x128xf32>
    %4 = vector.shape_cast %3 : vector<1x1x128xf32> to vector<1x128xf32>
    %cst = arith.constant dense<0.000000e+00> : vector<16x128xf32>
    %5 = tpu.matmul %0, %2, %cst {dimension_numbers = #tpu.dot_dimension_numbers<[1], [0], [0], [1], [0, 0, 1, 1], [], []>} : vector<16x128xf32>, vector<128x128xf32>, vector<16x128xf32> -> vector<16x128xf32>
    %6 = vector.broadcast %4 : vector<1x128xf32> to vector<16x128xf32>
    %7 = arith.addf %5, %6 : vector<16x128xf32>
    %cst_7 = arith.constant 0.000000e+00 : f32
    %8 = vector.broadcast %cst_7 : f32 to vector<16x128xf32>
    %9 = arith.maximumf %7, %8 : vector<16x128xf32>
    %c1 = arith.constant 1 : index
    %c0_8 = arith.constant 0 : index
    %c0_9 = arith.constant 0 : index
    %10 = vector.load %arg2[%c1, %c0_8, %c0_9] : memref<4x128x128xf32, #tpu.memory_space<vmem>>, vector<1x128x128xf32>
    %11 = vector.shape_cast %10 : vector<1x128x128xf32> to vector<128x128xf32>
    %c1_10 = arith.constant 1 : index
    %c0_11 = arith.constant 0 : index
    %c0_12 = arith.constant 0 : index
    %12 = vector.load %arg3[%c1_10, %c0_11, %c0_12] : memref<4x1x128xf32, #tpu.memory_space<vmem>>, vector<1x1x128xf32>
    %13 = vector.shape_cast %12 : vector<1x1x128xf32> to vector<1x128xf32>
    %cst_13 = arith.constant dense<0.000000e+00> : vector<16x128xf32>
    %14 = tpu.matmul %9, %11, %cst_13 {dimension_numbers = #tpu.dot_dimension_numbers<[1], [0], [0], [1], [0, 0, 1, 1], [], []>} : vector<16x128xf32>, vector<128x128xf32>, vector<16x128xf32> -> vector<16x128xf32>
    %15 = vector.broadcast %13 : vector<1x128xf32> to vector<16x128xf32>
    %16 = arith.addf %14, %15 : vector<16x128xf32>
    %cst_14 = arith.constant 0.000000e+00 : f32
    %17 = vector.broadcast %cst_14 : f32 to vector<16x128xf32>
    %18 = arith.maximumf %16, %17 : vector<16x128xf32>
    %c0_15 = arith.constant 0 : index
    %c0_16 = arith.constant 0 : index
    %19 = vector.load %arg5[%c0_15, %c0_16] : memref<16x128xf32, #tpu.memory_space<vmem>>, vector<16x128xf32>
    tpu.vector_store %arg5[%c0_15, %c0_16], %18 {strides = array<i32>} : memref<16x128xf32, #tpu.memory_space<vmem>>, vector<16x128xf32>,
    %c2 = arith.constant 2 : index
    %c0_17 = arith.constant 0 : index
    %c0_18 = arith.constant 0 : index
    %20 = vector.load %arg2[%c2, %c0_17, %c0_18] : memref<4x128x128xf32, #tpu.memory_space<vmem>>, vector<1x128x128xf32>
    %21 = vector.shape_cast %20 : vector<1x128x128xf32> to vector<128x128xf32>
    %c2_19 = arith.constant 2 : index
    %c0_20 = arith.constant 0 : index
    %c0_21 = arith.constant 0 : index
    %22 = vector.load %arg3[%c2_19, %c0_20, %c0_21] : memref<4x1x128xf32, #tpu.memory_space<vmem>>, vector<1x1x128xf32>
    %23 = vector.shape_cast %22 : vector<1x1x128xf32> to vector<1x128xf32>
    %cst_22 = arith.constant dense<0.000000e+00> : vector<16x128xf32>
    %24 = tpu.matmul %18, %21, %cst_22 {dimension_numbers = #tpu.dot_dimension_numbers<[1], [0], [0], [1], [0, 0, 1, 1], [], []>} : vector<16x128xf32>, vector<128x128xf32>, vector<16x128xf32> -> vector<16x128xf32>
    %25 = vector.broadcast %23 : vector<1x128xf32> to vector<16x128xf32>
    %26 = arith.addf %24, %25 : vector<16x128xf32>
    %cst_23 = arith.constant 0.000000e+00 : f32
    %27 = vector.broadcast %cst_23 : f32 to vector<16x128xf32>
    %28 = arith.maximumf %26, %27 : vector<16x128xf32>
    %c3 = arith.constant 3 : index
    %c0_24 = arith.constant 0 : index
    %c0_25 = arith.constant 0 : index
    %29 = vector.load %arg2[%c3, %c0_24, %c0_25] : memref<4x128x128xf32, #tpu.memory_space<vmem>>, vector<1x128x128xf32>
    %30 = vector.shape_cast %29 : vector<1x128x128xf32> to vector<128x128xf32>
    %c3_26 = arith.constant 3 : index
    %c0_27 = arith.constant 0 : index
    %c0_28 = arith.constant 0 : index
    %31 = vector.load %arg3[%c3_26, %c0_27, %c0_28] : memref<4x1x128xf32, #tpu.memory_space<vmem>>, vector<1x1x128xf32>
    %32 = vector.shape_cast %31 : vector<1x1x128xf32> to vector<1x128xf32>
    %cst_29 = arith.constant dense<0.000000e+00> : vector<16x128xf32>
    %33 = tpu.matmul %28, %30, %cst_29 {dimension_numbers = #tpu.dot_dimension_numbers<[1], [0], [0], [1], [0, 0, 1, 1], [], []>} : vector<16x128xf32>, vector<128x128xf32>, vector<16x128xf32> -> vector<16x128xf32>
    %34 = vector.broadcast %32 : vector<1x128xf32> to vector<16x128xf32>
    %35 = arith.addf %33, %34 : vector<16x128xf32>
    %36 = math.tanh %35 : vector<16x128xf32>
    %c0_30 = arith.constant 0 : index
    %c0_31 = arith.constant 0 : index
    %37 = vector.load %arg4[%c0_30, %c0_31] : memref<16x128xf32, #tpu.memory_space<vmem>>, vector<16x128xf32>
    tpu.vector_store %arg4[%c0_30, %c0_31], %36 {strides = array<i32>} : memref<16x128xf32, #tpu.memory_space<vmem>>, vector<16x128xf32>,
    return
  }
  func.func @transform_0(%arg0: i32) -> (i32, i32) {
    %c0_i32 = arith.constant 0 : i32
    %c0_i32_0 = arith.constant 0 : i32
    return %arg0, %c0_i32 : i32, i32
  }
  func.func @transform_1(%arg0: i32) -> (i32, i32, i32) {
    %c0_i32 = arith.constant 0 : i32
    %c0_i32_0 = arith.constant 0 : i32
    %c0_i32_1 = arith.constant 0 : i32
    %c0_i32_2 = arith.constant 0 : i32
    return %c0_i32, %c0_i32_0, %c0_i32_1 : i32, i32, i32
  }
  func.func @transform_2(%arg0: i32) -> (i32, i32, i32) {
    %c0_i32 = arith.constant 0 : i32
    %c0_i32_0 = arith.constant 0 : i32
    %c0_i32_1 = arith.constant 0 : i32
    %c0_i32_2 = arith.constant 0 : i32
    return %c0_i32, %c0_i32_0, %c0_i32_1 : i32, i32, i32
  }
  func.func @transform_3(%arg0: i32) -> (i32, i32) {
    %c0_i32 = arith.constant 0 : i32
    %c0_i32_0 = arith.constant 0 : i32
    return %arg0, %c0_i32 : i32, i32
  }
  func.func @transform_4(%arg0: i32) -> (i32, i32) {
    %c0_i32 = arith.constant 0 : i32
    %c0_i32_0 = arith.constant 0 : i32
    return %arg0, %c0_i32 : i32, i32
  }
}

</mosaic_0001>

<llo_original>
// kernel: tpu_custom_call.1
$region0: #{tpu_custom_call.1}
  #allocation0 [shape = 'u32[]', space=smem, size = 0x4, offset = 0x4, fixed_abs, tag = 'smem constant byte address 0x4 - core index']
  #allocation1 [shape = 'u32[72,128]{1,0:T(1,128)}', space=vmem, size = 0x9000, scoped, tag = 'internal scratch']
  %s0 = inlined_call_operand.hbm [shape: f32[16,128], index: 0, kind: input, shape index: {}]
  %s1 = inlined_call_operand.hbm [shape: f32[4,128,128], index: 1, kind: input, shape index: {}]
  %s2 = inlined_call_operand.hbm [shape: f32[4,1,128], index: 2, kind: input, shape index: {}]
  %s3 = inlined_call_operand.hbm [shape: f32[16,128], index: 3, kind: output, shape index: {0}]
  %s4 = inlined_call_operand.hbm [shape: f32[16,128], index: 4, kind: output, shape index: {1}]
  %5 = xla_tuple %s3, %s4
  %s6 = sld [smem:[#allocation0]]
  $region42: #{tpu_custom_call.1} parent=0
    _
  %s8 = ssub.s32 1, %s6
  %s9 = scalar_select 0, %s8, %s6
  $region1: #{tpu_custom_call.1} parent=0
    #allocation2 [shape = 'u8[8192]{0}', space=vmem, size = 0x2000, scoped, tag = 'input window, operand 0, single buffered']
    #allocation3 [shape = 's32[1]{0}', space=sflag, size = 0x4, scoped, tag = 'scoped memory for tpu_custom_call.1']
    #allocation4 [shape = 's32[1]{0}', space=sflag, size = 0x4, scoped, tag = 'scoped memory for tpu_custom_call.1']
    #allocation5 [shape = 'u8[262144]{0}', space=vmem, size = 0x40000, scoped, tag = 'input window, operand 1, single buffered']
    #allocation6 [shape = 's32[1]{0}', space=sflag, size = 0x4, scoped, tag = 'scoped memory for tpu_custom_call.1']
    #allocation7 [shape = 'u8[2048]{0}', space=vmem, size = 0x800, scoped, tag = 'input window, operand 2, single buffered']
    #allocation8 [shape = 'u8[8192]{0}', space=vmem, size = 0x2000, scoped, tag = 'output window, operand 0, single buffered']
    #allocation9 [shape = 'u8[8192]{0}', space=vmem, size = 0x2000, scoped, tag = 'output window, operand 1, single buffered']
    #allocation10 [shape = 's32[1]{0}', space=sflag, size = 0x4, scoped, tag = 'scoped memory for tpu_custom_call.1']
    %10 = vsyncpa [#allocation3], 0
    %11 = vsyncpa [#allocation6], 0
    %12 = vsyncpa [#allocation4], 0
    %13 = vsyncpa [#allocation10], 0
    // Predicated region
    $region2: #{tpu_custom_call.1} parent=1 // pred_check
      _
    $region3: #{tpu_custom_call.1} parent=1 // pred_check_branch
      %15 = sbr.rel (0) target = $region5
    $region4: #{tpu_custom_call.1} parent=1 // pred_region
      %17 = vsyncadd [#allocation3], 0
      %s18 = sshll.u32 %s0, 4
      %s19 = int_to_ptr.hbm [resolvable:$true] %s18
      %s20 = sshll.u32 [#allocation2], 4
      %s21 = int_to_ptr.vmem [resolvable:$true] %s20
      %26 = dma.hbm_to_vmem [thread:$0]  %s19, 256, %s21, [#allocation3], 128, 128, 8
    $region5: #{tpu_custom_call.1} parent=1 // pred_fallthru
      _
    // Predicated region
    $region6: #{tpu_custom_call.1} parent=1 // pred_check
      _
    $region7: #{tpu_custom_call.1} parent=1 // pred_check_branch
      %28 = sbr.rel (0) target = $region9
    $region8: #{tpu_custom_call.1} parent=1 // pred_region
      %30 = vsyncadd [#allocation6], 0
      %s31 = sshll.u32 %s1, 4
      %s32 = int_to_ptr.hbm [resolvable:$true] %s31
      %s33 = sshll.u32 [#allocation5], 4
      %s34 = int_to_ptr.vmem [resolvable:$true] %s33
      %39 = dma.hbm_to_vmem [thread:$0]  %s32, 8192, %s34, [#allocation6], 128, 128, 8
    $region9: #{tpu_custom_call.1} parent=1 // pred_fallthru
      _
    // Predicated region
    $region10: #{tpu_custom_call.1} parent=1 // pred_check
      _
    $region11: #{tpu_custom_call.1} parent=1 // pred_check_branch
      %41 = sbr.rel (0) target = $region13
    $region12: #{tpu_custom_call.1} parent=1 // pred_region
      %43 = vsyncadd [#allocation6], 0
      %s44 = sshll.u32 %s2, 4
      %s45 = int_to_ptr.hbm [resolvable:$true] %s44
      %s46 = sshll.u32 [#allocation7], 4
      %s47 = int_to_ptr.vmem [resolvable:$true] %s46
      %52 = dma.hbm_to_vmem [thread:$0]  %s45, 64, %s47, [#allocation6], 16, 16, 1
    $region13: #{tpu_custom_call.1} parent=1 // pred_fallthru
      _
    // Predicated region
    $region14: #{tpu_custom_call.1} parent=1 // pred_check
      _
    $region15: #{tpu_custom_call.1} parent=1 // pred_check_branch
      %54 = sbr.rel (0) target = $region17
    $region16: #{tpu_custom_call.1} parent=1 // pred_region
      %56 = dma.done [#allocation3], 256
    $region17: #{tpu_custom_call.1} parent=1 // pred_fallthru
      _
    // Predicated region
    $region18: #{tpu_custom_call.1} parent=1 // pred_check
      _
    $region19: #{tpu_custom_call.1} parent=1 // pred_check_branch
      %58 = sbr.rel (0) target = $region21
    $region20: #{tpu_custom_call.1} parent=1 // pred_region
      %60 = dma.done [#allocation6], 8192
    $region21: #{tpu_custom_call.1} parent=1 // pred_fallthru
      _
    // Predicated region
    $region22: #{tpu_custom_call.1} parent=1 // pred_check
      _
    $region23: #{tpu_custom_call.1} parent=1 // pred_check_branch
      %62 = sbr.rel (0) target = $region25
    $region24: #{tpu_custom_call.1} parent=1 // pred_region
      %64 = dma.done [#allocation6], 64
    $region25: #{tpu_custom_call.1} parent=1 // pred_fallthru
      _
    %v65 = vld [vmem:[#allocation2] sm:$0xff]
    %v66 = vld [vmem:[#allocation2 + $0x8] sm:$0xff]
    %v67 = vld [vmem:[#allocation5] sm:$0xff]
    %v68 = vld [vmem:[#allocation5 + $0x8] sm:$0xff]
    %v69 = vld [vmem:[#allocation5 + $0x10] sm:$0xff]
    %v70 = vld [vmem:[#allocation5 + $0x18] sm:$0xff]
    %v71 = vld [vmem:[#allocation5 + $0x20] sm:$0xff]
    %v72 = vld [vmem:[#allocation5 + $0x28] sm:$0xff]
    %v73 = vld [vmem:[#allocation5 + $0x30] sm:$0xff]
    %v74 = vld [vmem:[#allocation5 + $0x38] sm:$0xff]
    %v75 = vld [vmem:[#allocation5 + $0x40] sm:$0xff]
    %v76 = vld [vmem:[#allocation5 + $0x48] sm:$0xff]
    %v77 = vld [vmem:[#allocation5 + $0x50] sm:$0xff]
    %v78 = vld [vmem:[#allocation5 + $0x58] sm:$0xff]
    %v79 = vld [vmem:[#allocation5 + $0x60] sm:$0xff]
    %v80 = vld [vmem:[#allocation5 + $0x68] sm:$0xff]
    %v81 = vld [vmem:[#allocation5 + $0x70] sm:$0xff]
    %v82 = vld [vmem:[#allocation5 + $0x78] sm:$0xff]
    %v83 = vld [vmem:[#allocation7] sm:$0x1]
    %v85 = vperm.slane %v83, 0
    %87 = vmatpush.msra.mxu0 %v82
    %88 = vmatpush.msra.mxu0 %v81
    %89 = vmatpush.msra.mxu0 %v80
    %90 = vmatpush.msra.mxu0 %v79
    %91 = vmatpush.msra.mxu0 %v78
    %92 = vmatpush.msra.mxu0 %v77
    %93 = vmatpush.msra.mxu0 %v76
    %94 = vmatpush.msra.mxu0 %v75
    %95 = vmatpush.msra.mxu0 %v74
    %96 = vmatpush.msra.mxu0 %v73
    %97 = vmatpush.msra.mxu0 %v72
    %98 = vmatpush.msra.mxu0 %v71
    %99 = vmatpush.msra.mxu0 %v70
    %100 = vmatpush.msra.mxu0 %v69
    %101 = vmatpush.msra.mxu0 %v68
    %102 = vmatpush.msra.mxu0 %v67
    %103 = vmatmul.f32.gmra.mxu0 %v65
    %v104 = vpop.f32.mrf.mxu0
    %v105 = vadd.f32 %v85, %v104
    %106 = vmatmul.f32.gmra.mxu0 %v66
    %v107 = vpop.f32.mrf.mxu0
    %v108 = vadd.f32 %v85, %v107
    %109 = vdwg.mxu0
    %v110 = vmax.f32 %v105, 0.0
    %v111 = vmax.f32 %v108, 0.0
    %s112 = scalar_lea.vmem [#allocation5], 128
    %v113 = vld [vmem:[%s112] sm:$0xff]
    %v114 = vld [vmem:[%s112 + $0x8] sm:$0xff]
    %v115 = vld [vmem:[%s112 + $0x10] sm:$0xff]
    %v116 = vld [vmem:[%s112 + $0x18] sm:$0xff]
    %v117 = vld [vmem:[%s112 + $0x20] sm:$0xff]
    %v118 = vld [vmem:[%s112 + $0x28] sm:$0xff]
    %v119 = vld [vmem:[%s112 + $0x30] sm:$0xff]
    %v120 = vld [vmem:[%s112 + $0x38] sm:$0xff]
    %v121 = vld [vmem:[%s112 + $0x40] sm:$0xff]
    %v122 = vld [vmem:[%s112 + $0x48] sm:$0xff]
    %v123 = vld [vmem:[%s112 + $0x50] sm:$0xff]
    %v124 = vld [vmem:[%s112 + $0x58] sm:$0xff]
    %v125 = vld [vmem:[%s112 + $0x60] sm:$0xff]
    %v126 = vld [vmem:[%s112 + $0x68] sm:$0xff]
    %v127 = vld [vmem:[%s112 + $0x70] sm:$0xff]
    %v128 = vld [vmem:[%s112 + $0x78] sm:$0xff]
    %s129 = scalar_lea.vmem [#allocation7], 1
    %v130 = vld [vmem:[%s129] sm:$0x1]
    %v132 = vperm.slane %v130, 0
    %134 = vmatpush.msra.mxu0 %v128
    %135 = vmatpush.msra.mxu0 %v127
    %136 = vmatpush.msra.mxu0 %v126
    %137 = vmatpush.msra.mxu0 %v125
    %138 = vmatpush.msra.mxu0 %v124
    %139 = vmatpush.msra.mxu0 %v123
    %140 = vmatpush.msra.mxu0 %v122
    %141 = vmatpush.msra.mxu0 %v121
    %142 = vmatpush.msra.mxu0 %v120
    %143 = vmatpush.msra.mxu0 %v119
    %144 = vmatpush.msra.mxu0 %v118
    %145 = vmatpush.msra.mxu0 %v117
    %146 = vmatpush.msra.mxu0 %v116
    %147 = vmatpush.msra.mxu0 %v115
    %148 = vmatpush.msra.mxu0 %v114
    %149 = vmatpush.msra.mxu0 %v113
    %150 = vmatmul.f32.gmra.mxu0 %v110
    %v151 = vpop.f32.mrf.mxu0
    %v152 = vadd.f32 %v132, %v151
    %153 = vmatmul.f32.gmra.mxu0 %v111
    %v154 = vpop.f32.mrf.mxu0
    %v155 = vadd.f32 %v132, %v154
    %156 = vdwg.mxu0
    %v157 = vmax.f32 %v152, 0.0
    %v158 = vmax.f32 %v155, 0.0
    %159 = vst [vmem:[#allocation9] sm:$0xff] %v157
    %160 = vst [vmem:[#allocation9 + $0x8] sm:$0xff] %v158
    %s161 = scalar_lea.vmem [#allocation5], 256
    %v162 = vld [vmem:[%s161] sm:$0xff]
    %v163 = vld [vmem:[%s161 + $0x8] sm:$0xff]
    %v164 = vld [vmem:[%s161 + $0x10] sm:$0xff]
    %v165 = vld [vmem:[%s161 + $0x18] sm:$0xff]
    %v166 = vld [vmem:[%s161 + $0x20] sm:$0xff]
    %v167 = vld [vmem:[%s161 + $0x28] sm:$0xff]
    %v168 = vld [vmem:[%s161 + $0x30] sm:$0xff]
    %v169 = vld [vmem:[%s161 + $0x38] sm:$0xff]
    %v170 = vld [vmem:[%s161 + $0x40] sm:$0xff]
    %v171 = vld [vmem:[%s161 + $0x48] sm:$0xff]
    %v172 = vld [vmem:[%s161 + $0x50] sm:$0xff]
    %v173 = vld [vmem:[%s161 + $0x58] sm:$0xff]
    %v174 = vld [vmem:[%s161 + $0x60] sm:$0xff]
    %v175 = vld [vmem:[%s161 + $0x68] sm:$0xff]
    %v176 = vld [vmem:[%s161 + $0x70] sm:$0xff]
    %v177 = vld [vmem:[%s161 + $0x78] sm:$0xff]
    %s178 = scalar_lea.vmem [#allocation7], 2
    %v179 = vld [vmem:[%s178] sm:$0x1]
    %v181 = vperm.slane %v179, 0
    %183 = vmatpush.msra.mxu0 %v177
    %184 = vmatpush.msra.mxu0 %v176
    %185 = vmatpush.msra.mxu0 %v175
    %186 = vmatpush.msra.mxu0 %v174
    %187 = vmatpush.msra.mxu0 %v173
    %188 = vmatpush.msra.mxu0 %v172
    %189 = vmatpush.msra.mxu0 %v171
    %190 = vmatpush.msra.mxu0 %v170
    %191 = vmatpush.msra.mxu0 %v169
    %192 = vmatpush.msra.mxu0 %v168
    %193 = vmatpush.msra.mxu0 %v167
    %194 = vmatpush.msra.mxu0 %v166
    %195 = vmatpush.msra.mxu0 %v165
    %196 = vmatpush.msra.mxu0 %v164
    %197 = vmatpush.msra.mxu0 %v163
    %198 = vmatpush.msra.mxu0 %v162
    %199 = vmatmul.f32.gmra.mxu0 %v157
    %v200 = vpop.f32.mrf.mxu0
    %v201 = vadd.f32 %v181, %v200
    %202 = vmatmul.f32.gmra.mxu0 %v158
    %v203 = vpop.f32.mrf.mxu0
    %v204 = vadd.f32 %v181, %v203
    %205 = vdwg.mxu0
    %v206 = vmax.f32 %v201, 0.0
    %v207 = vmax.f32 %v204, 0.0
    %s208 = scalar_lea.vmem [#allocation5], 384
    %v209 = vld [vmem:[%s208] sm:$0xff]
    %v210 = vld [vmem:[%s208 + $0x8] sm:$0xff]
    %v211 = vld [vmem:[%s208 + $0x10] sm:$0xff]
    %v212 = vld [vmem:[%s208 + $0x18] sm:$0xff]
    %v213 = vld [vmem:[%s208 + $0x20] sm:$0xff]
    %v214 = vld [vmem:[%s208 + $0x28] sm:$0xff]
    %v215 = vld [vmem:[%s208 + $0x30] sm:$0xff]
    %v216 = vld [vmem:[%s208 + $0x38] sm:$0xff]
    %v217 = vld [vmem:[%s208 + $0x40] sm:$0xff]
    %v218 = vld [vmem:[%s208 + $0x48] sm:$0xff]
    %v219 = vld [vmem:[%s208 + $0x50] sm:$0xff]
    %v220 = vld [vmem:[%s208 + $0x58] sm:$0xff]
    %v221 = vld [vmem:[%s208 + $0x60] sm:$0xff]
    %v222 = vld [vmem:[%s208 + $0x68] sm:$0xff]
    %v223 = vld [vmem:[%s208 + $0x70] sm:$0xff]
    %v224 = vld [vmem:[%s208 + $0x78] sm:$0xff]
    %s225 = scalar_lea.vmem [#allocation7], 3
    %v226 = vld [vmem:[%s225] sm:$0x1]
    %v228 = vperm.slane %v226, 0
    %230 = vmatpush.msra.mxu0 %v224
    %231 = vmatpush.msra.mxu0 %v223
    %232 = vmatpush.msra.mxu0 %v222
    %233 = vmatpush.msra.mxu0 %v221
    %234 = vmatpush.msra.mxu0 %v220
    %235 = vmatpush.msra.mxu0 %v219
    %236 = vmatpush.msra.mxu0 %v218
    %237 = vmatpush.msra.mxu0 %v217
    %238 = vmatpush.msra.mxu0 %v216
    %239 = vmatpush.msra.mxu0 %v215
    %240 = vmatpush.msra.mxu0 %v214
    %241 = vmatpush.msra.mxu0 %v213
    %242 = vmatpush.msra.mxu0 %v212
    %243 = vmatpush.msra.mxu0 %v211
    %244 = vmatpush.msra.mxu0 %v210
    %245 = vmatpush.msra.mxu0 %v209
    %246 = vmatmul.f32.gmra.mxu0 %v206
    %v247 = vpop.f32.mrf.mxu0
    %v248 = vadd.f32 %v228, %v247
    %249 = vmatmul.f32.gmra.mxu0 %v207
    %v250 = vpop.f32.mrf.mxu0
    %v251 = vadd.f32 %v228, %v250
    %252 = vdwg.mxu0
    %v253 = vtanh.pop %v248
    %v254 = vtanh.pop %v251
    %255 = vst [vmem:[#allocation8] sm:$0xff] %v253
    %256 = vst [vmem:[#allocation8 + $0x8] sm:$0xff] %v254
    // Predicated region
    $region26: #{tpu_custom_call.1} parent=1 // pred_check
      _
    $region27: #{tpu_custom_call.1} parent=1 // pred_check_branch
      %258 = sbr.rel (0) target = $region29
    $region28: #{tpu_custom_call.1} parent=1 // pred_region
      %260 = vsyncadd [#allocation4], 0
      %s261 = sshll.u32 [#allocation8], 4
      %s262 = int_to_ptr.vmem [resolvable:$true] %s261
      %s263 = sshll.u32 %s3, 4
      %s264 = int_to_ptr.hbm [resolvable:$true] %s263
      %269 = dma.vmem_to_hbm [thread:$0]  %s262, 256, %s264, [#allocation4], 128, 128, 8
    $region29: #{tpu_custom_call.1} parent=1 // pred_fallthru
      _
    // Predicated region
    $region30: #{tpu_custom_call.1} parent=1 // pred_check
      _
    $region31: #{tpu_custom_call.1} parent=1 // pred_check_branch
      %271 = sbr.rel (0) target = $region33
    $region32: #{tpu_custom_call.1} parent=1 // pred_region
      %273 = vsyncadd [#allocation10], 0
      %s274 = sshll.u32 [#allocation9], 4
      %s275 = int_to_ptr.vmem [resolvable:$true] %s274
      %s276 = sshll.u32 %s4, 4
      %s277 = int_to_ptr.hbm [resolvable:$true] %s276
      %282 = dma.vmem_to_hbm [thread:$0]  %s275, 256, %s277, [#allocation10], 128, 128, 8
    $region33: #{tpu_custom_call.1} parent=1 // pred_fallthru
      _
    // Predicated region
    $region34: #{tpu_custom_call.1} parent=1 // pred_check
      _
    $region35: #{tpu_custom_call.1} parent=1 // pred_check_branch
      %284 = sbr.rel (0) target = $region37
    $region36: #{tpu_custom_call.1} parent=1 // pred_region
      %286 = dma.done [#allocation4], 256
    $region37: #{tpu_custom_call.1} parent=1 // pred_fallthru
      _
    // Predicated region
    $region38: #{tpu_custom_call.1} parent=1 // pred_check
      _
    $region39: #{tpu_custom_call.1} parent=1 // pred_check_branch
      %288 = sbr.rel (0) target = $region41
    $region40: #{tpu_custom_call.1} parent=1 // pred_region
      %290 = dma.done [#allocation10], 256
    $region41: #{tpu_custom_call.1} parent=1 // pred_fallthru
      _
    %291 = vsyncpa [#allocation3], 1
    %292 = vsyncpa [#allocation6], 1
    %293 = vsyncpa [#allocation4], 1
    %294 = vsyncpa [#allocation10], 1

</llo_original>
